<compile_context>
chip_gen: v6e
topology: v6e:2x2x1
jax: 0.10.0
libtpu: 0.0.40
codegen_flags: <defaults>
</compile_context>

<pallas_src>
import functools

import jax
import jax.numpy as jnp
from jax.experimental import pallas as pl
from jax.experimental.pallas import tpu as pltpu


LANE_WIDTH = 512            # last dim of the 2-D presentation (multiple of 128)
MAX_TILE_ROWS = 1024        # 1024 x 512 f32 = 2 MiB per block
MIN_GRID_STEPS = 4          # keep >= 4 grid steps when possible (v7x 2-TC sharding)
SMALL_N_THRESHOLD = 1 << 19 # ~512K elements: below this, fused XLA FMA wins


def _round_up(x, m):
    return ((x + m - 1) // m) * m


def _vmem_limit_bytes():
    # Half of physical VMEM, capped at 64 MiB:
    #   v5e/v6e (128 MiB physical) -> 64 MiB; v7x (64 MiB physical) -> 32 MiB.
    cap = None
    try:
        cap = getattr(pltpu.get_tpu_info(), "vmem_capacity_bytes", None)
    except Exception:
        cap = None
    if not cap:
        return 32 * 1024 * 1024  # conservative (v7x-safe) fallback
    return min(cap // 2, 64 * 1024 * 1024)


VMEM_LIMIT_BYTES = _vmem_limit_bytes()


def scaler_kernel(w_ref, b_ref, x_ref, o_ref):
    # w_ref, b_ref: SMEM (1, 1) scalars; x_ref, o_ref: VMEM (tile_r, LANE_WIDTH) tiles.
    w = w_ref[0, 0]
    b = b_ref[0, 0]
    o_ref[...] = x_ref[...] * w + b  # f32 scalar-broadcast FMA on the VPU


def _scaler_pallas(x, w_smem, b_smem):
    n = x.shape[0]
    c = LANE_WIDTH
    rows = pl.cdiv(n, c)
    n_pad = rows * c  # pad only to the next lane-width multiple (<= 511 elements)

    # Block rows: as large as 2 MiB allows, but keep >= MIN_GRID_STEPS grid steps
    # for small inputs so pipelining / 2-TC sharding still has work to overlap.
    tile_r = min(MAX_TILE_ROWS, max(8, _round_up(pl.cdiv(rows, MIN_GRID_STEPS), 8)))

    xp = x if n_pad == n else jnp.pad(x, (0, n_pad - n))
    x2d = xp.reshape(rows, c)  # sublane- and lane-dense slab

    grid = (pl.cdiv(rows, tile_r),)  # partial edge block is masked by Pallas
    out2d = pl.pallas_call(
        scaler_kernel,
        out_shape=jax.ShapeDtypeStruct((rows, c), jnp.float32),
        grid=grid,
        in_specs=[
            pl.BlockSpec(memory_space=pltpu.SMEM),        # w (1,1) scalar
            pl.BlockSpec(memory_space=pltpu.SMEM),        # b (1,1) scalar
            pl.BlockSpec((tile_r, c), lambda i: (i, 0)),  # x tile, auto double-buffered
        ],
        out_specs=pl.BlockSpec((tile_r, c), lambda i: (i, 0)),
        compiler_params=pltpu.CompilerParams(
            # "parallel": lets the runtime split tiles across v7x's 2 TCs;
            # no-op on single-TC v5e/v6e.
            dimension_semantics=("parallel",),
            vmem_limit_bytes=VMEM_LIMIT_BYTES,
        ),
    )(w_smem, b_smem, x2d)

    out1d = out2d.reshape(n_pad)
    return out1d if n_pad == n else out1d[:n]


@functools.partial(jax.jit, static_argnames=("force_pallas",))
def scaler_model_forward(x, weight, bias, force_pallas=False):
    """x: (N,) float32, weight: (1,1) float32, bias: (1,) float32 -> (N,) float32."""
    n = x.shape[0]
    x = x.astype(jnp.float32)
    w = jnp.asarray(weight, jnp.float32).reshape(1, 1)
    b = jnp.asarray(bias, jnp.float32).reshape(1, 1)

    if (not force_pallas) and n < SMALL_N_THRESHOLD:
        # Tiny / moderate inputs: a fused XLA multiply-add is roofline-bound already
        # and avoids kernel-launch + wrapper overhead.
        return x * w[0, 0] + b[0, 0]

    return _scaler_pallas(x, w, b)


if __name__ == "__main__":
    key = jax.random.PRNGKey(0)
    kx1, kx2, kx3, kw, kb = jax.random.split(key, 5)

    # Deterministic synthetic parameters for nn.Linear(1, 1): weight (1,1), bias (1,)
    weight = jax.random.normal(kw, (1, 1), dtype=jnp.float32)
    bias = jax.random.normal(kb, (1,), dtype=jnp.float32)
    w = weight[0, 0]
    b = bias[0]

    # --- Pallas path, N not a multiple of the lane width:
    #     <512-element pad, 4-step grid, masked partial edge block.
    N1 = 100_000
    x1 = jax.random.normal(kx1, (N1,), dtype=jnp.float32)
    y1 = jax.block_until_ready(scaler_model_forward(x1, weight, bias, force_pallas=True))
    assert y1.shape == (N1,)
    assert jnp.allclose(y1, x1 * w + b, atol=1e-6, rtol=1e-6)

    # --- Pallas path, N an exact multiple of the lane width (no pad, no tail slice).
    N2 = 4096
    x2 = jax.random.normal(kx2, (N2,), dtype=jnp.float32)
    y2 = jax.block_until_ready(scaler_model_forward(x2, weight, bias, force_pallas=True))
    assert y2.shape == (N2,)
    assert jnp.allclose(y2, x2 * w + b, atol=1e-6, rtol=1e-6)

    # --- Small-N auto path: bypasses Pallas (fused XLA multiply-add under jit).
    N3 = 256
    x3 = jax.random.normal(kx3, (N3,), dtype=jnp.float32)
    y3 = jax.block_until_ready(scaler_model_forward(x3, weight, bias))
    assert y3.shape == (N3,)
    assert jnp.allclose(y3, x3 * w + b, atol=1e-6, rtol=1e-6)

    print("KERNEL_OK")
</pallas_src>

<mosaic_0001>
module attributes {stable_mosaic.version = 11 : i64} {
  func.func @scaler_kernel(%arg0: i32, %arg1: memref<1x1xf32, #tpu.memory_space<smem>>, %arg2: memref<1x1xf32, #tpu.memory_space<smem>>, %arg3: memref<56x512xf32, #tpu.memory_space<vmem>>, %arg4: memref<56x512xf32, #tpu.memory_space<vmem>>) attributes {dimension_semantics = [#tpu.dimension_semantics<parallel>], iteration_bounds = array<i64: 4>, scalar_prefetch = 0 : i64, scratch_operands = 0 : i64, tpu.core_type = #tpu.core_type<tc>, window_params = [{transform_indices = @transform_0, window_bounds = array<i64: 1, 1>}, {transform_indices = @transform_1, window_bounds = array<i64: 1, 1>}, {transform_indices = @transform_2, window_bounds = array<i64: 56, 512>}, {transform_indices = @transform_3, window_bounds = array<i64: 56, 512>}]} {
    %c0 = arith.constant 0 : index
    %c0_0 = arith.constant 0 : index
    %0 = memref.load %arg1[%c0, %c0_0] : memref<1x1xf32, #tpu.memory_space<smem>>
    %c0_1 = arith.constant 0 : index
    %c0_2 = arith.constant 0 : index
    %1 = memref.load %arg2[%c0_1, %c0_2] : memref<1x1xf32, #tpu.memory_space<smem>>
    %c0_3 = arith.constant 0 : index
    %c0_4 = arith.constant 0 : index
    %2 = vector.load %arg3[%c0_3, %c0_4] : memref<56x512xf32, #tpu.memory_space<vmem>>, vector<56x512xf32>
    %3 = vector.broadcast %0 : f32 to vector<56x512xf32>
    %4 = arith.mulf %2, %3 : vector<56x512xf32>
    %5 = vector.broadcast %1 : f32 to vector<56x512xf32>
    %6 = arith.addf %4, %5 : vector<56x512xf32>
    %c0_5 = arith.constant 0 : index
    %c0_6 = arith.constant 0 : index
    %7 = vector.load %arg4[%c0_5, %c0_6] : memref<56x512xf32, #tpu.memory_space<vmem>>, vector<56x512xf32>
    tpu.vector_store %arg4[%c0_5, %c0_6], %6 {strides = array<i32>} : memref<56x512xf32, #tpu.memory_space<vmem>>, vector<56x512xf32>,
    return
  }
  func.func @transform_0(%arg0: i32) -> (i32, i32) {
    %c0_i32 = arith.constant 0 : i32
    %c0_i32_0 = arith.constant 0 : i32
    %c0_i32_1 = arith.constant 0 : i32
    return %c0_i32, %c0_i32_0 : i32, i32
  }
  func.func @transform_1(%arg0: i32) -> (i32, i32) {
    %c0_i32 = arith.constant 0 : i32
    %c0_i32_0 = arith.constant 0 : i32
    %c0_i32_1 = arith.constant 0 : i32
    return %c0_i32, %c0_i32_0 : i32, i32
  }
  func.func @transform_2(%arg0: i32) -> (i32, i32) {
    %c0_i32 = arith.constant 0 : i32
    %c0_i32_0 = arith.constant 0 : i32
    return %arg0, %c0_i32 : i32, i32
  }
  func.func @transform_3(%arg0: i32) -> (i32, i32) {
    %c0_i32 = arith.constant 0 : i32
    %c0_i32_0 = arith.constant 0 : i32
    return %arg0, %c0_i32 : i32, i32
  }
}

</mosaic_0001>

<llo_original>
// kernel: scaler_model_forward.1
$region0: #{scaler_model_forward.1}
  #allocation0 [shape = 'u32[]', space=smem, size = 0x4, offset = 0x4, fixed_abs, tag = 'smem constant byte address 0x4 - core index']
  #allocation1 [shape = 'u32[144,128]{1,0:T(1,128)}', space=vmem, size = 0x12000, scoped, tag = 'internal scratch']
  #allocation2 [shape = 'f32[1,1]{1,0:T(1,128)S(6)}', space=smem, size = 0x200, scoped, tag = 'scoped memory for scaler_model_forward.1']
  #allocation3 [shape = 'f32[1,1]{1,0:T(1,128)S(6)}', space=smem, size = 0x200, scoped, tag = 'scoped memory for scaler_model_forward.1']
  %s0 = inlined_call_operand.<no memory space> [shape: f32[1,1], index: 0, kind: input, shape index: {}]
  %s1 = inlined_call_operand.<no memory space> [shape: f32[1,1], index: 1, kind: input, shape index: {}]
  %s2 = inlined_call_operand.vmem [shape: f32[196,512], index: 2, kind: input, shape index: {}]
  %s3 = inlined_call_operand.vmem [shape: f32[196,512], index: 3, kind: output, shape index: {}]
  %s4 = sld [smem:[#allocation0]]
  $region71: #{scaler_model_forward.1} parent=0
    _
  %s6 = ssub.s32 1, %s4
  %s7 = scalar_select 0, %s6, %s4
  %8 = sst [smem:[#allocation2]] %s0
  %9 = sst [smem:[#allocation3]] %s1
  $region1: #{scaler_model_forward.1} parent=0
    #allocation4 [shape = 'u8[229376]{0}', space=vmem, size = 0x38000, scoped, tag = 'output window, operand 0']
    loop: start=0, step=1, limit=6
    $region2: #{scaler_model_forward.1} parent=1 // loop_pre_header
      _
    $region3: #{scaler_model_forward.1} parent=1 // loop_header
      %s11 = sphi 0, %s15
      %p12 = scmp.ge.s32.totalorder %s11, 6
      %s19 = sphi 0, %s19
      %s21 = sphi 0, %s19
      %s22 = sphi 0, %s21
      %s36 = sphi 0, %s22
      %s40 = sphi 0, %s40
      %s42 = sphi 0, %s40
      %s43 = sphi 0, %s42
      %s57 = sphi 0, %s43
      %s63 = sphi 0, %s65
      %s66 = sphi 0, %s63
      %s67 = sphi 0, %s66
      %s83 = sphi 0, %s67
      %s89 = sphi 0, %s91
      %s92 = sphi 0, %s89
      %s93 = sphi 0, %s92
      %s109 = sphi 0, %s93
    $region4: #{scaler_model_forward.1} parent=1 // loop_header_branch
      %14 = sbr.rel (%p12) target = $region8
    $region5: #{scaler_model_forward.1} parent=1 // loop_body
      %s16 = ssub.s32 %s11, 1
      %s17 = ssub.s32 %s11, 2
      %s18 = sadd.s32 %s11, 1
      %s20 = sadd.s32 %s19, 1
      %p23 = scmp.eq.s32.totalorder %s11, 3
      %p24 = scmp.ne.s32.totalorder %s19, %s21
      %p25 = scmp.eq.s32.totalorder %s11, 0
      %p26 = por %p24, %p25
      %p27 = scmp.ne.s32.totalorder %s19, %s21
      %p28 = scmp.eq.s32.totalorder %s16, 3
      %p29 = por %p27, %p28
      %p30 = scmp.ne.s32.totalorder %s21, %s22
      %p31 = scmp.eq.s32.totalorder %s16, 0
      %p32 = por %p30, %p31
      %p33 = scmp.ne.s32.totalorder %s21, %s22
      %p34 = scmp.eq.s32.totalorder %s17, 3
      %p35 = por %p33, %p34
      %p37 = scmp.ne.s32.totalorder %s22, %s36
      %p38 = scmp.eq.s32.totalorder %s17, 0
      %p39 = por %p37, %p38
      %s41 = sadd.s32 %s40, 1
      %p44 = scmp.eq.s32.totalorder %s11, 3
      %p45 = scmp.ne.s32.totalorder %s40, %s42
      %p46 = scmp.eq.s32.totalorder %s11, 0
      %p47 = por %p45, %p46
      %p48 = scmp.ne.s32.totalorder %s40, %s42
      %p49 = scmp.eq.s32.totalorder %s16, 3
      %p50 = por %p48, %p49
      %p51 = scmp.ne.s32.totalorder %s42, %s43
      %p52 = scmp.eq.s32.totalorder %s16, 0
      %p53 = por %p51, %p52
      %p54 = scmp.ne.s32.totalorder %s42, %s43
      %p55 = scmp.eq.s32.totalorder %s17, 3
      %p56 = por %p54, %p55
      %p58 = scmp.ne.s32.totalorder %s43, %s57
      %p59 = scmp.eq.s32.totalorder %s17, 0
      %p60 = por %p58, %p59
      %s61 = ssub.s32 %s11, %s18
      %p62 = scmp.eq.s32.totalorder %s61, 0
      %s64 = sadd.s32 %s63, 1
      %s65 = scalar_select %p62, %s63, %s64
      %p68 = pneg %p62
      %p69 = scmp.eq.s32.totalorder %s11, 3
      %p70 = por %p68, %p69
      %p71 = scmp.ne.s32.totalorder %s63, %s66
      %p72 = scmp.eq.s32.totalorder %s11, 0
      %p73 = por %p71, %p72
      %p74 = scmp.ne.s32.totalorder %s63, %s66
      %p75 = scmp.eq.s32.totalorder %s16, 3
      %p76 = por %p74, %p75
      %p77 = scmp.ne.s32.totalorder %s66, %s67
      %p78 = scmp.eq.s32.totalorder %s16, 0
      %p79 = por %p77, %p78
      %p80 = scmp.ne.s32.totalorder %s66, %s67
      %p81 = scmp.eq.s32.totalorder %s17, 3
      %p82 = por %p80, %p81
      %p84 = scmp.ne.s32.totalorder %s67, %s83
      %p85 = scmp.eq.s32.totalorder %s17, 0
      %p86 = por %p84, %p85
      %s87 = ssub.s32 %s11, %s18
      %p88 = scmp.eq.s32.totalorder %s87, 0
      %s90 = sadd.s32 %s89, 1
      %s91 = scalar_select %p88, %s89, %s90
      %p94 = pneg %p88
      %p95 = scmp.eq.s32.totalorder %s11, 3
      %p96 = por %p94, %p95
      %p97 = scmp.ne.s32.totalorder %s89, %s92
      %p98 = scmp.eq.s32.totalorder %s11, 0
      %p99 = por %p97, %p98
      %p100 = scmp.ne.s32.totalorder %s89, %s92
      %p101 = scmp.eq.s32.totalorder %s16, 3
      %p102 = por %p100, %p101
      %p103 = scmp.ne.s32.totalorder %s92, %s93
      %p104 = scmp.eq.s32.totalorder %s16, 0
      %p105 = por %p103, %p104
      %p106 = scmp.ne.s32.totalorder %s92, %s93
      %p107 = scmp.eq.s32.totalorder %s17, 3
      %p108 = por %p106, %p107
      %p110 = scmp.ne.s32.totalorder %s93, %s109
      %p111 = scmp.eq.s32.totalorder %s17, 0
      %p112 = por %p110, %p111
      %p113 = scmp.le.s32.totalorder 1, %s11
      %p114 = scmp.lt.s32.totalorder %s11, 5
      %p115 = pnand %p113, %p114
      %p116 = pneg %p115
      // Predicated region
      $region9: #{scaler_model_forward.1} parent=5 // pred_check
        _
      $region10: #{scaler_model_forward.1} parent=5 // pred_check_branch
        %118 = sbr.rel (%p115) target = $region12
      $region11: #{scaler_model_forward.1} parent=5 // pred_region
        %s119 = ssub.s32 %s11, 1
        // Predicated region
        $region13: #{scaler_model_forward.1} parent=11 // pred_check
          %p120 = pneg %p32
        $region14: #{scaler_model_forward.1} parent=11 // pred_check_branch
          %122 = sbr.rel (%p120) target = $region16
        $region15: #{scaler_model_forward.1} parent=11 // pred_region
          _
        $region16: #{scaler_model_forward.1} parent=11 // pred_fallthru
          _
        // Predicated region
        $region17: #{scaler_model_forward.1} parent=11 // pred_check
          %p123 = pneg %p53
        $region18: #{scaler_model_forward.1} parent=11 // pred_check_branch
          %125 = sbr.rel (%p123) target = $region20
        $region19: #{scaler_model_forward.1} parent=11 // pred_region
          _
        $region20: #{scaler_model_forward.1} parent=11 // pred_fallthru
          _
      $region12: #{scaler_model_forward.1} parent=5 // pred_fallthru
        _
      %p126 = scmp.lt.s32.totalorder %s11, 4
      // Predicated region
      $region21: #{scaler_model_forward.1} parent=5 // pred_check
        %p127 = pneg %p126
      $region22: #{scaler_model_forward.1} parent=5 // pred_check_branch
        %129 = sbr.rel (%p127) target = $region24
      $region23: #{scaler_model_forward.1} parent=5 // pred_region
        // Predicated region
        $region25: #{scaler_model_forward.1} parent=23 // pred_check
          %p130 = pneg %p73
        $region26: #{scaler_model_forward.1} parent=23 // pred_check_branch
          %132 = sbr.rel (%p130) target = $region28
        $region27: #{scaler_model_forward.1} parent=23 // pred_region
          %s133 = smul.u32 7, %s11
          %s134 = ssub.s32 25, %s133
          %p135 = scmp.lt.s32.totalorder %s134, 7
          %s136 = scalar_select %p135, %s134, 7
          %s137 = smul.u32 128, %s136
          %s138 = smul.u32 %s137, 4
          %p139 = scmp.lt.s32.totalorder %s133, 24
          %s140 = scalar_select %p139, %s133, 24
          %s141 = smul.addr %s140, 4
          %s142 = smul.addr %s141, 8
          %s143 = scalar_lea.vmem %s2, %s142
          %s144 = smul.u32 7, %s11
          %s145 = ssub.s32 25, %s144
          %p146 = scmp.lt.s32.totalorder %s145, 7
          %s147 = scalar_select %p146, %s145, 7
          %s148 = smul.u32 128, %s147
          %s149 = smul.u32 %s148, 4
        $region28: #{scaler_model_forward.1} parent=23 // pred_fallthru
          _
      $region24: #{scaler_model_forward.1} parent=5 // pred_fallthru
        _
      %p150 = scmp.le.s32.totalorder 1, %s11
      %p151 = scmp.lt.s32.totalorder %s11, 5
      %p152 = pnand %p150, %p151
      %p153 = pneg %p152
      // Predicated region
      $region29: #{scaler_model_forward.1} parent=5 // pred_check
        _
      $region30: #{scaler_model_forward.1} parent=5 // pred_check_branch
        %155 = sbr.rel (%p152) target = $region32
      $region31: #{scaler_model_forward.1} parent=5 // pred_region
        %s156 = ssub.s32 %s11, 1
        %p157 = pneg %p32
        %p158 = pneg %p29
        %p159 = pneg %p53
        %p160 = pneg %p50
        %s161 = smul.u32 7, %s16
        %s162 = ssub.s32 25, %s161
        %p163 = scmp.lt.s32.totalorder %s162, 7
        %s164 = scalar_select %p163, %s162, 7
        %s165 = smul.u32 128, %s164
        %s166 = smul.u32 %s165, 4
        %p167 = scmp.lt.s32.totalorder %s161, 24
        %s168 = scalar_select %p167, %s161, 24
        %s169 = smul.addr %s168, 4
        %s170 = smul.addr %s169, 8
        %s171 = scalar_lea.vmem %s2, %s170
        %p172 = pneg %p79
        %p173 = pneg %p76
        %p174 = pneg %p105
        %p175 = pneg %p102
        %s176 = sand.u32 %s92, 1
        %s177 = sand.u32 %s92, 1
        %s178 = smul.addr %s177, 224
        %s179 = scalar_lea.vmem [#allocation4], %s178
        %s180 = smul.u32 7, %s16
        %s181 = ssub.s32 25, %s180
        %p182 = scmp.lt.s32.totalorder %s181, 7
        %s183 = scalar_select %p182, %s181, 7
        %s184 = smul.u32 128, %s183
        %s185 = smul.u32 %s184, 4
        %p186 = scmp.lt.s32.totalorder %s180, 24
        %s187 = scalar_select %p186, %s180, 24
        %s188 = smul.addr %s187, 4
        %s189 = smul.addr %s188, 8
        %s190 = scalar_lea.vmem %s2, %s189
        %s191 = smul.u32 7, %s16
        %s192 = ssub.s32 25, %s191
        %p193 = scmp.lt.s32.totalorder %s192, 7
        %s194 = scalar_select %p193, %s192, 7
        %s195 = smul.u32 128, %s194
        %s196 = smul.u32 %s195, 4
        %s197 = smul.u32 7, %s16
        %s198 = ssub.s32 25, %s197
        %p199 = scmp.lt.s32.totalorder %s198, 7
        %s200 = scalar_select %p199, %s198, 7
        %s201 = smul.u32 128, %s200
        %s202 = smul.u32 %s201, 4
        %s203 = sld [smem:[#allocation2]]
        %s204 = sld [smem:[#allocation3]]
        %v205 = vld [vmem:[%s190] sm:$0xff]
        %v206 = vld [vmem:[%s190 + $0x8] sm:$0xff]
        %v207 = vld [vmem:[%s190 + $0x10] sm:$0xff]
        %v208 = vld [vmem:[%s190 + $0x18] sm:$0xff]
        %v209 = vld [vmem:[%s190 + $0x20] sm:$0xff]
        %v210 = vld [vmem:[%s190 + $0x28] sm:$0xff]
        %v211 = vld [vmem:[%s190 + $0x30] sm:$0xff]
        %v212 = vld [vmem:[%s190 + $0x38] sm:$0xff]
        %v213 = vld [vmem:[%s190 + $0x40] sm:$0xff]
        %v214 = vld [vmem:[%s190 + $0x48] sm:$0xff]
        %v215 = vld [vmem:[%s190 + $0x50] sm:$0xff]
        %v216 = vld [vmem:[%s190 + $0x58] sm:$0xff]
        %v217 = vld [vmem:[%s190 + $0x60] sm:$0xff]
        %v218 = vld [vmem:[%s190 + $0x68] sm:$0xff]
        %v219 = vld [vmem:[%s190 + $0x70] sm:$0xff]
        %v220 = vld [vmem:[%s190 + $0x78] sm:$0xff]
        %v221 = vld [vmem:[%s190 + $0x80] sm:$0xff]
        %v222 = vld [vmem:[%s190 + $0x88] sm:$0xff]
        %v223 = vld [vmem:[%s190 + $0x90] sm:$0xff]
        %v224 = vld [vmem:[%s190 + $0x98] sm:$0xff]
        %v225 = vld [vmem:[%s190 + $0xa0] sm:$0xff]
        %v226 = vld [vmem:[%s190 + $0xa8] sm:$0xff]
        %v227 = vld [vmem:[%s190 + $0xb0] sm:$0xff]
        %v228 = vld [vmem:[%s190 + $0xb8] sm:$0xff]
        %v229 = vld [vmem:[%s190 + $0xc0] sm:$0xff]
        %v230 = vld [vmem:[%s190 + $0xc8] sm:$0xff]
        %v231 = vld [vmem:[%s190 + $0xd0] sm:$0xff]
        %v232 = vld [vmem:[%s190 + $0xd8] sm:$0xff]
        %v233 = vstv %s203
        %v234 = vmul.f32 %v205, %v233
        %v235 = vmul.f32 %v206, %v233
        %v236 = vmul.f32 %v207, %v233
        %v237 = vmul.f32 %v208, %v233
        %v238 = vmul.f32 %v209, %v233
        %v239 = vmul.f32 %v210, %v233
        %v240 = vmul.f32 %v211, %v233
        %v241 = vmul.f32 %v212, %v233
        %v242 = vmul.f32 %v213, %v233
        %v243 = vmul.f32 %v214, %v233
        %v244 = vmul.f32 %v215, %v233
        %v245 = vmul.f32 %v216, %v233
        %v246 = vmul.f32 %v217, %v233
        %v247 = vmul.f32 %v218, %v233
        %v248 = vmul.f32 %v219, %v233
        %v249 = vmul.f32 %v220, %v233
        %v250 = vmul.f32 %v221, %v233
        %v251 = vmul.f32 %v222, %v233
        %v252 = vmul.f32 %v223, %v233
        %v253 = vmul.f32 %v224, %v233
        %v254 = vmul.f32 %v225, %v233
        %v255 = vmul.f32 %v226, %v233
        %v256 = vmul.f32 %v227, %v233
        %v257 = vmul.f32 %v228, %v233
        %v258 = vmul.f32 %v229, %v233
        %v259 = vmul.f32 %v230, %v233
        %v260 = vmul.f32 %v231, %v233
        %v261 = vmul.f32 %v232, %v233
        %v262 = vstv %s204
        %v263 = vadd.f32 %v234, %v262
        %v264 = vadd.f32 %v235, %v262
        %v265 = vadd.f32 %v236, %v262
        %v266 = vadd.f32 %v237, %v262
        %v267 = vadd.f32 %v238, %v262
        %v268 = vadd.f32 %v239, %v262
        %v269 = vadd.f32 %v240, %v262
        %v270 = vadd.f32 %v241, %v262
        %v271 = vadd.f32 %v242, %v262
        %v272 = vadd.f32 %v243, %v262
        %v273 = vadd.f32 %v244, %v262
        %v274 = vadd.f32 %v245, %v262
        %v275 = vadd.f32 %v246, %v262
        %v276 = vadd.f32 %v247, %v262
        %v277 = vadd.f32 %v248, %v262
        %v278 = vadd.f32 %v249, %v262
        %v279 = vadd.f32 %v250, %v262
        %v280 = vadd.f32 %v251, %v262
        %v281 = vadd.f32 %v252, %v262
        %v282 = vadd.f32 %v253, %v262
        %v283 = vadd.f32 %v254, %v262
        %v284 = vadd.f32 %v255, %v262
        %v285 = vadd.f32 %v256, %v262
        %v286 = vadd.f32 %v257, %v262
        %v287 = vadd.f32 %v258, %v262
        %v288 = vadd.f32 %v259, %v262
        %v289 = vadd.f32 %v260, %v262
        %v290 = vadd.f32 %v261, %v262
        %291 = vst [vmem:[%s179] sm:$0xff] %v263
        %292 = vst [vmem:[%s179 + $0x8] sm:$0xff] %v264
        %293 = vst [vmem:[%s179 + $0x10] sm:$0xff] %v265
        %294 = vst [vmem:[%s179 + $0x18] sm:$0xff] %v266
        %295 = vst [vmem:[%s179 + $0x20] sm:$0xff] %v267
        %296 = vst [vmem:[%s179 + $0x28] sm:$0xff] %v268
        %297 = vst [vmem:[%s179 + $0x30] sm:$0xff] %v269
        %298 = vst [vmem:[%s179 + $0x38] sm:$0xff] %v270
        %299 = vst [vmem:[%s179 + $0x40] sm:$0xff] %v271
        %300 = vst [vmem:[%s179 + $0x48] sm:$0xff] %v272
        %301 = vst [vmem:[%s179 + $0x50] sm:$0xff] %v273
        %302 = vst [vmem:[%s179 + $0x58] sm:$0xff] %v274
        %303 = vst [vmem:[%s179 + $0x60] sm:$0xff] %v275
        %304 = vst [vmem:[%s179 + $0x68] sm:$0xff] %v276
        %305 = vst [vmem:[%s179 + $0x70] sm:$0xff] %v277
        %306 = vst [vmem:[%s179 + $0x78] sm:$0xff] %v278
        %307 = vst [vmem:[%s179 + $0x80] sm:$0xff] %v279
        %308 = vst [vmem:[%s179 + $0x88] sm:$0xff] %v280
        %309 = vst [vmem:[%s179 + $0x90] sm:$0xff] %v281
        %310 = vst [vmem:[%s179 + $0x98] sm:$0xff] %v282
        %311 = vst [vmem:[%s179 + $0xa0] sm:$0xff] %v283
        %312 = vst [vmem:[%s179 + $0xa8] sm:$0xff] %v284
        %313 = vst [vmem:[%s179 + $0xb0] sm:$0xff] %v285
        %314 = vst [vmem:[%s179 + $0xb8] sm:$0xff] %v286
        %315 = vst [vmem:[%s179 + $0xc0] sm:$0xff] %v287
        %316 = vst [vmem:[%s179 + $0xc8] sm:$0xff] %v288
        %317 = vst [vmem:[%s179 + $0xd0] sm:$0xff] %v289
        %318 = vst [vmem:[%s179 + $0xd8] sm:$0xff] %v290
        %s319 = sand.u32 %s92, 1
        %s320 = sand.u32 %s92, 1
        %s321 = smul.addr %s320, 224
        %s322 = scalar_lea.vmem [#allocation4], %s321
        // Predicated region
        $region33: #{scaler_model_forward.1} parent=31 // pred_check
          %p323 = pneg %p102
        $region34: #{scaler_model_forward.1} parent=31 // pred_check_branch
          %325 = sbr.rel (%p323) target = $region36
        $region35: #{scaler_model_forward.1} parent=31 // pred_region
          %s326 = smul.u32 7, %s16
          %s327 = ssub.s32 25, %s326
          %p328 = scmp.lt.s32.totalorder %s327, 7
          %s329 = scalar_select %p328, %s327, 7
          %s330 = smul.u32 128, %s329
          %s331 = smul.u32 %s330, 4
          %p332 = scmp.ne.s32.totalorder 0, %s331
          %s333 = smul.addr %s326, 4
          %s334 = smul.addr %s333, 8
          %s335 = scalar_lea.vmem %s3, %s334
          // Predicated region
          $region37: #{scaler_model_forward.1} parent=35 // pred_check
            %p336 = pneg %p332
          $region38: #{scaler_model_forward.1} parent=35 // pred_check_branch
            %338 = sbr.rel (%p336) target = $region40
          $region39: #{scaler_model_forward.1} parent=35 // pred_region
            // Predicated region
            $region41: #{scaler_model_forward.1} parent=39 // pred_check
              _
            $region42: #{scaler_model_forward.1} parent=39 // pred_check_branch
              %340 = sbr.rel (0) target = $region44
            $region43: #{scaler_model_forward.1} parent=39 // pred_region
              %s341 = sdiv.u32.pop %s329, 7
              %s342 = srem.u32.pop %s329, 7
              // While loop
              $region45: #{scaler_model_forward.1} parent=43 // loop_pre_header
                _
              $region46: #{scaler_model_forward.1} parent=43 // loop_header
                %s344 = sphi 0, %s346
                %p345 = scmp.ge.s32.totalorder %s344, %s341
                %s349 = sphi 0, %s410
                %s350 = sphi %s322, %s413
                %s351 = sphi %s335, %s414
              $region47: #{scaler_model_forward.1} parent=43 // loop_header_branch
                %348 = sbr.rel (%p345) target = $region51
              $region48: #{scaler_model_forward.1} parent=43 // loop_body
                %v352 = vld [vmem:[%s350] sm:$0xff]
                %353 = vst [vmem:[%s351] sm:$0xff] %v352
                %v354 = vld [vmem:[%s350 + $0x20] sm:$0xff]
                %355 = vst [vmem:[%s351 + $0x20] sm:$0xff] %v354
                %v356 = vld [vmem:[%s350 + $0x40] sm:$0xff]
                %357 = vst [vmem:[%s351 + $0x40] sm:$0xff] %v356
                %v358 = vld [vmem:[%s350 + $0x60] sm:$0xff]
                %359 = vst [vmem:[%s351 + $0x60] sm:$0xff] %v358
                %v360 = vld [vmem:[%s350 + $0x80] sm:$0xff]
                %361 = vst [vmem:[%s351 + $0x80] sm:$0xff] %v360
                %v362 = vld [vmem:[%s350 + $0xa0] sm:$0xff]
                %363 = vst [vmem:[%s351 + $0xa0] sm:$0xff] %v362
                %v364 = vld [vmem:[%s350 + $0xc0] sm:$0xff]
                %365 = vst [vmem:[%s351 + $0xc0] sm:$0xff] %v364
                %v366 = vld [vmem:[%s350 + $0x8] sm:$0xff]
                %367 = vst [vmem:[%s351 + $0x8] sm:$0xff] %v366
                %v368 = vld [vmem:[%s350 + $0x28] sm:$0xff]
                %369 = vst [vmem:[%s351 + $0x28] sm:$0xff] %v368
                %v370 = vld [vmem:[%s350 + $0x48] sm:$0xff]
                %371 = vst [vmem:[%s351 + $0x48] sm:$0xff] %v370
                %v372 = vld [vmem:[%s350 + $0x68] sm:$0xff]
                %373 = vst [vmem:[%s351 + $0x68] sm:$0xff] %v372
                %v374 = vld [vmem:[%s350 + $0x88] sm:$0xff]
                %375 = vst [vmem:[%s351 + $0x88] sm:$0xff] %v374
                %v376 = vld [vmem:[%s350 + $0xa8] sm:$0xff]
                %377 = vst [vmem:[%s351 + $0xa8] sm:$0xff] %v376
                %v378 = vld [vmem:[%s350 + $0xc8] sm:$0xff]
                %379 = vst [vmem:[%s351 + $0xc8] sm:$0xff] %v378
                %v380 = vld [vmem:[%s350 + $0x10] sm:$0xff]
                %381 = vst [vmem:[%s351 + $0x10] sm:$0xff] %v380
                %v382 = vld [vmem:[%s350 + $0x30] sm:$0xff]
                %383 = vst [vmem:[%s351 + $0x30] sm:$0xff] %v382
                %v384 = vld [vmem:[%s350 + $0x50] sm:$0xff]
                %385 = vst [vmem:[%s351 + $0x50] sm:$0xff] %v384
                %v386 = vld [vmem:[%s350 + $0x70] sm:$0xff]
                %387 = vst [vmem:[%s351 + $0x70] sm:$0xff] %v386
                %v388 = vld [vmem:[%s350 + $0x90] sm:$0xff]
                %389 = vst [vmem:[%s351 + $0x90] sm:$0xff] %v388
                %v390 = vld [vmem:[%s350 + $0xb0] sm:$0xff]
                %391 = vst [vmem:[%s351 + $0xb0] sm:$0xff] %v390
                %v392 = vld [vmem:[%s350 + $0xd0] sm:$0xff]
                %393 = vst [vmem:[%s351 + $0xd0] sm:$0xff] %v392
                %v394 = vld [vmem:[%s350 + $0x18] sm:$0xff]
                %395 = vst [vmem:[%s351 + $0x18] sm:$0xff] %v394
                %v396 = vld [vmem:[%s350 + $0x38] sm:$0xff]
                %397 = vst [vmem:[%s351 + $0x38] sm:$0xff] %v396
                %v398 = vld [vmem:[%s350 + $0x58] sm:$0xff]
                %399 = vst [vmem:[%s351 + $0x58] sm:$0xff] %v398
                %v400 = vld [vmem:[%s350 + $0x78] sm:$0xff]
                %401 = vst [vmem:[%s351 + $0x78] sm:$0xff] %v400
                %v402 = vld [vmem:[%s350 + $0x98] sm:$0xff]
                %403 = vst [vmem:[%s351 + $0x98] sm:$0xff] %v402
                %v404 = vld [vmem:[%s350 + $0xb8] sm:$0xff]
                %405 = vst [vmem:[%s351 + $0xb8] sm:$0xff] %v404
                %v406 = vld [vmem:[%s350 + $0xd8] sm:$0xff]
                %407 = vst [vmem:[%s351 + $0xd8] sm:$0xff] %v406
                %s408 = sadd.s32 1, %s349
                %p409 = scmp.ge.s32.totalorder %s408, %s341
                %s410 = scalar_select %p409, 0, %s408
                %s411 = smul.u32 %s410, 224
                %s412 = smul.u32 %s410, 224
                %s413 = scalar_lea.vmem %s322, %s411 [#allocation4]
                %s414 = scalar_lea.vmem %s335, %s412
              $region49: #{scaler_model_forward.1} parent=43 // loop_footer
                %s346 = sadd.s32 %s344, 1
              $region50: #{scaler_model_forward.1} parent=43 // loop_footer_branch
                %343 = sbr.rel target = $region46
              $region51: #{scaler_model_forward.1} parent=43 // loop_exit
                _
              %s415 = sdiv.u32.pop %s329, 7
              %s416 = srem.u32.pop %s329, 7
              %s417 = smul.u32 %s415, 7
              %s418 = smul.u32 32, %s417
              %s419 = scalar_lea.vmem %s322, %s418 [#allocation4]
              %s420 = smul.u32 32, %s417
              %s421 = scalar_lea.vmem %s335, %s420
              // While loop
              $region52: #{scaler_model_forward.1} parent=43 // loop_pre_header
                _
              $region53: #{scaler_model_forward.1} parent=43 // loop_header
                %s423 = sphi 0, %s425
                %p424 = scmp.ge.s32.totalorder %s423, %s416
                %s428 = sphi 0, %s441
                %s429 = sphi %s419, %s444
                %s430 = sphi %s421, %s445
              $region54: #{scaler_model_forward.1} parent=43 // loop_header_branch
                %427 = sbr.rel (%p424) target = $region58
              $region55: #{scaler_model_forward.1} parent=43 // loop_body
                %v431 = vld [vmem:[%s429] sm:$0xff]
                %432 = vst [vmem:[%s430] sm:$0xff] %v431
                %v433 = vld [vmem:[%s429 + $0x8] sm:$0xff]
                %434 = vst [vmem:[%s430 + $0x8] sm:$0xff] %v433
                %v435 = vld [vmem:[%s429 + $0x10] sm:$0xff]
                %436 = vst [vmem:[%s430 + $0x10] sm:$0xff] %v435
                %v437 = vld [vmem:[%s429 + $0x18] sm:$0xff]
                %438 = vst [vmem:[%s430 + $0x18] sm:$0xff] %v437
                %s439 = sadd.s32 1, %s428
                %p440 = scmp.ge.s32.totalorder %s439, %s416
                %s441 = scalar_select %p440, 0, %s439
                %s442 = smul.u32 %s441, 32
                %s443 = smul.u32 %s441, 32
                %s444 = scalar_lea.vmem %s419, %s442 [#allocation4]
                %s445 = scalar_lea.vmem %s421, %s443
              $region56: #{scaler_model_forward.1} parent=43 // loop_footer
                %s425 = sadd.s32 %s423, 1
              $region57: #{scaler_model_forward.1} parent=43 // loop_footer_branch
                %422 = sbr.rel target = $region53
              $region58: #{scaler_model_forward.1} parent=43 // loop_exit
                _
            $region44: #{scaler_model_forward.1} parent=39 // pred_fallthru
              _
            // Predicated region
            $region59: #{scaler_model_forward.1} parent=39 // pred_check
              _
            $region60: #{scaler_model_forward.1} parent=39 // pred_check_branch
              %447 = sbr.rel target = $region62
            $region61: #{scaler_model_forward.1} parent=39 // pred_region
              _
            $region62: #{scaler_model_forward.1} parent=39 // pred_fallthru
              _
          $region40: #{scaler_model_forward.1} parent=35 // pred_fallthru
            _
          %448 = vnop
        $region36: #{scaler_model_forward.1} parent=31 // pred_fallthru
          _
      $region32: #{scaler_model_forward.1} parent=5 // pred_fallthru
        _
      %p449 = scmp.le.s32.totalorder 2, %s11
      // Predicated region
      $region63: #{scaler_model_forward.1} parent=5 // pred_check
        %p450 = pneg %p449
      $region64: #{scaler_model_forward.1} parent=5 // pred_check_branch
        %452 = sbr.rel (%p450) target = $region66
      $region65: #{scaler_model_forward.1} parent=5 // pred_region
        %s453 = ssub.s32 %s11, 2
        // Predicated region
        $region67: #{scaler_model_forward.1} parent=65 // pred_check
          %p454 = pneg %p108
        $region68: #{scaler_model_forward.1} parent=65 // pred_check_branch
          %456 = sbr.rel (%p454) target = $region70
        $region69: #{scaler_model_forward.1} parent=65 // pred_region
          %s457 = sand.u32 %s93, 1
          %s458 = sand.u32 %s93, 1
          %s459 = smul.addr %s458, 224
          %s460 = scalar_lea.vmem [#allocation4], %s459
        $region70: #{scaler_model_forward.1} parent=65 // pred_fallthru
          _
      $region66: #{scaler_model_forward.1} parent=5 // pred_fallthru
        _
    $region6: #{scaler_model_forward.1} parent=1 // loop_footer
      %s15 = sadd.s32 1, %s11
    $region7: #{scaler_model_forward.1} parent=1 // loop_footer_branch
      %10 = sbr.rel target = $region3
    $region8: #{scaler_model_forward.1} parent=1 // loop_exit
      _

</llo_original>
